<compile_context>
chip_gen: v7x
topology: tpu7x:2x2x1
jax: 0.10.0
libtpu: 0.0.40
codegen_flags: <defaults>
</compile_context>

<pallas_src>
import functools

import jax
import jax.numpy as jnp
from jax.experimental import pallas as pl
from jax.experimental.pallas import tpu as pltpu


def _round_up(x: int, m: int) -> int:
    return ((x + m - 1) // m) * m


def _graph_head_kernel(batch_ref, x_ref, w1_ref, b1_ref, w2_ref, b2_ref,
                       out_ref, acc_ref, *, compute_dtype):
    """One node-tile: MLP -> per-node logit -> partial segment-sum into acc."""
    step = pl.program_id(0)

    @pl.when(step == 0)
    def _init():
        acc_ref[...] = jnp.zeros_like(acc_ref)

    # ---- MLP over this tile of nodes (MXU matmuls, f32 accumulation) ----
    x = x_ref[...].astype(compute_dtype)                           # [T, D]
    w1 = w1_ref[...].astype(compute_dtype)                         # [D, D]
    h = jnp.dot(x, w1, preferred_element_type=jnp.float32) + b1_ref[...]
    h = h * jax.nn.sigmoid(h)                                      # SiLU (VPU/EUP)
    y = jnp.dot(h.astype(compute_dtype),
                w2_ref[...].astype(compute_dtype),
                preferred_element_type=jnp.float32) + b2_ref[0]    # [T, 1] f32

    # ---- segment-sum: one-hot built directly as [B, T] (no transpose) ----
    batch_row = batch_ref[...]                                     # [1, T] int32 (lane-major)
    n_graphs = acc_ref.shape[0]
    seg = jax.lax.broadcasted_iota(jnp.int32, (n_graphs, batch_row.shape[1]), 0)
    one_hot = (batch_row == seg).astype(jnp.float32)               # [B, T]

    # [B, T] @ [T, 1] -> [B, 1]; padded nodes (batch id -1) match no row.
    acc_ref[...] += jnp.dot(one_hot, y, preferred_element_type=jnp.float32)

    @pl.when(step == pl.num_programs(0) - 1)
    def _flush():
        out_ref[...] = acc_ref[...]


def graph_binary_classification_head(x, batch, n_molecules, params, *,
                                     tile_n=512,
                                     compute_dtype=jnp.bfloat16):
    """x: [N, d_model] node features ('energy'); batch: [N] int32 graph ids."""
    n_nodes, d_model = x.shape
    w1, b1, w2, b2 = params

    # --- tile sizing (lane/sublane-legal blocks on every TPU generation) ---
    n8 = _round_up(max(n_nodes, 1), 8)
    if n8 <= tile_n:
        tile_n = n8                         # single full-extent tile
    else:
        tile_n = _round_up(tile_n, 128)     # multi-tile: lane-legal block width
    n_pad = _round_up(n_nodes, tile_n)
    num_tiles = n_pad // tile_n
    b_pad = _round_up(max(n_molecules, 1), 8)

    # --- pad inputs; padded nodes get batch id -1 so they match no graph ---
    x_p = jnp.pad(x, ((0, n_pad - n_nodes), (0, 0)))
    batch_p = jnp.pad(batch.astype(jnp.int32), (0, n_pad - n_nodes),
                      constant_values=-1).reshape(1, n_pad)
    b1_p = b1.reshape(1, d_model).astype(jnp.float32)
    w2_p = w2.reshape(d_model, 1)
    b2_p = b2.reshape(1).astype(jnp.float32)

    grid_spec = pltpu.PrefetchScalarGridSpec(
        num_scalar_prefetch=0,
        grid=(num_tiles,),
        in_specs=[
            pl.BlockSpec((1, tile_n), lambda i: (0, i)),           # batch ids (lane-major)
            pl.BlockSpec((tile_n, d_model), lambda i: (i, 0)),     # x tile
            pl.BlockSpec((d_model, d_model), lambda i: (0, 0)),    # W1 (resident)
            pl.BlockSpec((1, d_model), lambda i: (0, 0)),          # b1 (resident)
            pl.BlockSpec((d_model, 1), lambda i: (0, 0)),          # w2 (resident)
            pl.BlockSpec(memory_space=pltpu.MemorySpace.SMEM),     # b2 scalar in SMEM
        ],
        out_specs=pl.BlockSpec((b_pad, 1), lambda i: (0, 0)),      # resident output
        scratch_shapes=[pltpu.VMEM((b_pad, 1), jnp.float32)],      # segment-sum accumulator
    )

    itemsize = jnp.dtype(x_p.dtype).itemsize
    cost = pl.CostEstimate(
        flops=int(2 * n_pad * d_model * d_model        # x @ W1
                  + 2 * n_pad * d_model                # h @ w2
                  + 2 * n_pad * b_pad),                # segment-sum matmul
        transcendentals=int(n_pad * d_model),          # sigmoid in SiLU
        bytes_accessed=int(n_pad * d_model * itemsize  # x
                           + n_pad * 4                 # batch ids
                           + d_model * d_model * 4 + d_model * 8 + 4
                           + b_pad * 4),
    )

    out = pl.pallas_call(
        functools.partial(_graph_head_kernel, compute_dtype=compute_dtype),
        out_shape=jax.ShapeDtypeStruct((b_pad, 1), jnp.float32),
        grid_spec=grid_spec,
        compiler_params=pltpu.CompilerParams(
            dimension_semantics=("arbitrary",),        # node axis is a reduction
            vmem_limit_bytes=32 * 1024 * 1024,         # safe on v5e/v6e/v7x
        ),
        cost_estimate=cost,
    )(batch_p, x_p, w1, b1_p, w2_p, b2_p)

    # rearrange 'b 1 -> b' and drop graph-axis padding
    return out[:n_molecules, 0]


def _reference(x, batch, n_molecules, params):
    w1, b1, w2, b2 = params
    h = x.astype(jnp.float32) @ w1.astype(jnp.float32) + b1
    h = h * jax.nn.sigmoid(h)                                      # SiLU
    y = h @ w2.reshape(-1, 1) + b2.reshape(1, 1)                   # [N, 1]
    out = jax.ops.segment_sum(y, batch, num_segments=n_molecules)  # [B, 1]
    return out[:, 0]


if __name__ == "__main__":
    key = jax.random.PRNGKey(0)
    k1, k2 = jax.random.split(key)

    def make_case(k, n_nodes, d_model, n_molecules):
        k_x, k_b, k_w1, k_b1, k_w2, k_b2 = jax.random.split(k, 6)
        x = jax.random.normal(k_x, (n_nodes, d_model), dtype=jnp.float32)
        batch = jnp.sort(
            jax.random.randint(k_b, (n_nodes,), 0, n_molecules)).astype(jnp.int32)
        w1 = jax.random.normal(k_w1, (d_model, d_model), dtype=jnp.float32) * 0.1
        b1 = jax.random.normal(k_b1, (d_model,), dtype=jnp.float32) * 0.1
        w2 = jax.random.normal(k_w2, (d_model, 1), dtype=jnp.float32) * 0.1
        b2 = jax.random.normal(k_b2, (1,), dtype=jnp.float32) * 0.1
        return x, batch, (w1, b1, w2, b2)

    # Case 1: small, single tile, full-f32 compute path (tight tolerance).
    d_model, n_nodes, n_mol = 32, 8, 2
    x, _, params = make_case(k1, n_nodes, d_model, n_mol)
    batch = jnp.array([0, 0, 0, 1, 1, 1, 1, 1], dtype=jnp.int32)
    out = graph_binary_classification_head(
        x, batch, n_mol, params, compute_dtype=jnp.float32)
    out = jax.block_until_ready(out)
    ref = _reference(x, batch, n_mol, params)
    assert out.shape == (n_mol,), out.shape
    assert jnp.allclose(out, ref, atol=1e-5, rtol=1e-5), (out, ref)

    # Case 2: multi-tile grid (3 node tiles + padding), bf16 MXU inputs with
    # f32 accumulation (looser tolerance for bf16 rounding).
    n_nodes2, n_mol2 = 300, 4
    x2, batch2, params2 = make_case(k2, n_nodes2, d_model, n_mol2)
    out2 = graph_binary_classification_head(
        x2, batch2, n_mol2, params2, tile_n=128, compute_dtype=jnp.bfloat16)
    out2 = jax.block_until_ready(out2)
    ref2 = _reference(x2, batch2, n_mol2, params2)
    assert out2.shape == (n_mol2,), out2.shape
    assert jnp.allclose(out2, ref2, atol=1e-1, rtol=5e-2), (out2, ref2)

    print("KERNEL_OK")
</pallas_src>

<mosaic_0001>
module attributes {stable_mosaic.version = 11 : i64} {
  func.func @_graph_head_kernel(%arg0: i32, %arg1: memref<1x8xi32, #tpu.memory_space<vmem>>, %arg2: memref<8x32xf32, #tpu.memory_space<vmem>>, %arg3: memref<32x32xf32, #tpu.memory_space<vmem>>, %arg4: memref<1x32xf32, #tpu.memory_space<vmem>>, %arg5: memref<32x1xf32, #tpu.memory_space<vmem>>, %arg6: memref<1xf32, #tpu.memory_space<smem>>, %arg7: memref<8x1xf32, #tpu.memory_space<vmem>>, %arg8: memref<8x1xf32, #tpu.memory_space<vmem>>) attributes {dimension_semantics = [#tpu.dimension_semantics<arbitrary>], iteration_bounds = array<i64: 1>, scalar_prefetch = 0 : i64, scratch_operands = 1 : i64, tpu.core_type = #tpu.core_type<tc>, window_params = [{transform_indices = @transform_0, window_bounds = array<i64: 1, 8>}, {transform_indices = @transform_1, window_bounds = array<i64: 8, 32>}, {pipeline_mode = #tpu.pipeline_mode<synchronous>, transform_indices = @transform_2, window_bounds = array<i64: 32, 32>}, {pipeline_mode = #tpu.pipeline_mode<synchronous>, transform_indices = @transform_3, window_bounds = array<i64: 1, 32>}, {pipeline_mode = #tpu.pipeline_mode<synchronous>, transform_indices = @transform_4, window_bounds = array<i64: 32, 1>}, {transform_indices = @transform_5, window_bounds = array<i64: 1>}, {pipeline_mode = #tpu.pipeline_mode<synchronous>, transform_indices = @transform_6, window_bounds = array<i64: 8, 1>}]} {
    %c0_i32 = arith.constant 0 : i32
    %0 = arith.cmpi eq, %arg0, %c0_i32 : i32
    %1 = arith.extui %0 : i1 to i32
    %c0_i32_0 = arith.constant 0 : i32
    %2 = arith.cmpi ne, %1, %c0_i32_0 : i32
    scf.if %2 {
      %cst_20 = arith.constant 0.000000e+00 : f32
      %33 = vector.broadcast %cst_20 : f32 to vector<8x1xf32>
      %c0_21 = arith.constant 0 : index
      %c0_22 = arith.constant 0 : index
      %34 = vector.load %arg8[%c0_21, %c0_22] : memref<8x1xf32, #tpu.memory_space<vmem>>, vector<8x1xf32>
      tpu.vector_store %arg8[%c0_21, %c0_22], %33 {strides = array<i32>} : memref<8x1xf32, #tpu.memory_space<vmem>>, vector<8x1xf32>,
    } else {
    }
    %c0 = arith.constant 0 : index
    %c0_1 = arith.constant 0 : index
    %3 = vector.load %arg2[%c0, %c0_1] : memref<8x32xf32, #tpu.memory_space<vmem>>, vector<8x32xf32>
    %c0_2 = arith.constant 0 : index
    %c0_3 = arith.constant 0 : index
    %4 = vector.load %arg3[%c0_2, %c0_3] : memref<32x32xf32, #tpu.memory_space<vmem>>, vector<32x32xf32>
    %cst = arith.constant dense<0.000000e+00> : vector<8x32xf32>
    %5 = tpu.matmul %3, %4, %cst {dimension_numbers = #tpu.dot_dimension_numbers<[1], [0], [0], [1], [0, 0, 1, 1], [], []>} : vector<8x32xf32>, vector<32x32xf32>, vector<8x32xf32> -> vector<8x32xf32>
    %c0_4 = arith.constant 0 : index
    %c0_5 = arith.constant 0 : index
    %6 = vector.load %arg4[%c0_4, %c0_5] : memref<1x32xf32, #tpu.memory_space<vmem>>, vector<1x32xf32>
    %7 = vector.broadcast %6 : vector<1x32xf32> to vector<8x32xf32>
    %8 = arith.addf %5, %7 : vector<8x32xf32>
    %9 = arith.negf %8 : vector<8x32xf32>
    %10 = math.exp %9 : vector<8x32xf32>
    %cst_6 = arith.constant 1.000000e+00 : f32
    %11 = vector.broadcast %cst_6 : f32 to vector<8x32xf32>
    %12 = arith.addf %11, %10 : vector<8x32xf32>
    %13 = arith.divf %11, %12 : vector<8x32xf32>
    %14 = arith.mulf %8, %13 : vector<8x32xf32>
    %c0_7 = arith.constant 0 : index
    %c0_8 = arith.constant 0 : index
    %15 = vector.load %arg5[%c0_7, %c0_8] : memref<32x1xf32, #tpu.memory_space<vmem>>, vector<32x1xf32>
    %cst_9 = arith.constant dense<0.000000e+00> : vector<8x1xf32>
    %16 = tpu.matmul %14, %15, %cst_9 {dimension_numbers = #tpu.dot_dimension_numbers<[1], [0], [0], [1], [0, 0, 1, 1], [], []>} : vector<8x32xf32>, vector<32x1xf32>, vector<8x1xf32> -> vector<8x1xf32>
    %c0_10 = arith.constant 0 : index
    %17 = memref.load %arg6[%c0_10] : memref<1xf32, #tpu.memory_space<smem>>
    %18 = vector.broadcast %17 : f32 to vector<8x1xf32>
    %19 = arith.addf %16, %18 : vector<8x1xf32>
    %c0_11 = arith.constant 0 : index
    %c0_12 = arith.constant 0 : index
    %20 = vector.load %arg1[%c0_11, %c0_12] : memref<1x8xi32, #tpu.memory_space<vmem>>, vector<1x8xi32>
    %21 = tpu.iota {dimensions = array<i32: 0>} : vector<8x8xi32>
    %22 = vector.broadcast %20 : vector<1x8xi32> to vector<8x8xi32>
    %23 = arith.cmpi eq, %22, %21 : vector<8x8xi32>
    %24 = arith.extui %23 : vector<8x8xi1> to vector<8x8xi32>
    %25 = arith.sitofp %24 : vector<8x8xi32> to vector<8x8xf32>
    %c0_13 = arith.constant 0 : index
    %c0_14 = arith.constant 0 : index
    %26 = vector.load %arg8[%c0_13, %c0_14] : memref<8x1xf32, #tpu.memory_space<vmem>>, vector<8x1xf32>
    %cst_15 = arith.constant dense<0.000000e+00> : vector<8x1xf32>
    %27 = tpu.matmul %25, %19, %cst_15 {dimension_numbers = #tpu.dot_dimension_numbers<[1], [0], [0], [1], [0, 0, 1, 1], [], []>} : vector<8x8xf32>, vector<8x1xf32>, vector<8x1xf32> -> vector<8x1xf32>
    %28 = arith.addf %26, %27 : vector<8x1xf32>
    %c0_16 = arith.constant 0 : index
    %c0_17 = arith.constant 0 : index
    %29 = vector.load %arg8[%c0_16, %c0_17] : memref<8x1xf32, #tpu.memory_space<vmem>>, vector<8x1xf32>
    tpu.vector_store %arg8[%c0_16, %c0_17], %28 {strides = array<i32>} : memref<8x1xf32, #tpu.memory_space<vmem>>, vector<8x1xf32>,
    %c0_i32_18 = arith.constant 0 : i32
    %30 = arith.cmpi eq, %arg0, %c0_i32_18 : i32
    %31 = arith.extui %30 : i1 to i32
    %c0_i32_19 = arith.constant 0 : i32
    %32 = arith.cmpi ne, %31, %c0_i32_19 : i32
    scf.if %32 {
      %c0_20 = arith.constant 0 : index
      %c0_21 = arith.constant 0 : index
      %33 = vector.load %arg8[%c0_20, %c0_21] : memref<8x1xf32, #tpu.memory_space<vmem>>, vector<8x1xf32>
      %c0_22 = arith.constant 0 : index
      %c0_23 = arith.constant 0 : index
      %34 = vector.load %arg7[%c0_22, %c0_23] : memref<8x1xf32, #tpu.memory_space<vmem>>, vector<8x1xf32>
      tpu.vector_store %arg7[%c0_22, %c0_23], %33 {strides = array<i32>} : memref<8x1xf32, #tpu.memory_space<vmem>>, vector<8x1xf32>,
    } else {
    }
    return
  }
  func.func @transform_0(%arg0: i32) -> (i32, i32) {
    %c0_i32 = arith.constant 0 : i32
    %c0_i32_0 = arith.constant 0 : i32
    return %c0_i32, %arg0 : i32, i32
  }
  func.func @transform_1(%arg0: i32) -> (i32, i32) {
    %c0_i32 = arith.constant 0 : i32
    %c0_i32_0 = arith.constant 0 : i32
    return %arg0, %c0_i32 : i32, i32
  }
  func.func @transform_2(%arg0: i32) -> (i32, i32) {
    %c0_i32 = arith.constant 0 : i32
    %c0_i32_0 = arith.constant 0 : i32
    %c0_i32_1 = arith.constant 0 : i32
    return %c0_i32, %c0_i32_0 : i32, i32
  }
  func.func @transform_3(%arg0: i32) -> (i32, i32) {
    %c0_i32 = arith.constant 0 : i32
    %c0_i32_0 = arith.constant 0 : i32
    %c0_i32_1 = arith.constant 0 : i32
    return %c0_i32, %c0_i32_0 : i32, i32
  }
  func.func @transform_4(%arg0: i32) -> (i32, i32) {
    %c0_i32 = arith.constant 0 : i32
    %c0_i32_0 = arith.constant 0 : i32
    %c0_i32_1 = arith.constant 0 : i32
    return %c0_i32, %c0_i32_0 : i32, i32
  }
  func.func @transform_5(%arg0: i32) -> i32 {
    %c0_i32 = arith.constant 0 : i32
    %c0_i32_0 = arith.constant 0 : i32
    return %c0_i32 : i32
  }
  func.func @transform_6(%arg0: i32) -> (i32, i32) {
    %c0_i32 = arith.constant 0 : i32
    %c0_i32_0 = arith.constant 0 : i32
    %c0_i32_1 = arith.constant 0 : i32
    return %c0_i32, %c0_i32_0 : i32, i32
  }
}

</mosaic_0001>

<llo_original>
// kernel: tpu_custom_call.1
$region0: #{tpu_custom_call.1}
  #allocation0 [shape = 'u32[]', space=smem, size = 0x4, offset = 0x4, fixed_abs, tag = 'smem constant byte address 0x4 - core index']
  #allocation1 [shape = 'u32[144,128]{1,0:T(1,128)}', space=vmem, size = 0x12000, scoped, tag = 'internal scratch']
  #allocation2 [shape = 'f32[8,1]{1,0:T(8,128)}', space=vmem, size = 0x1000, scoped, tag = 'scratch operand']
  #allocation3 [shape = 'f32[1]{0:T(128)S(6)}', space=smem, size = 0x200, scoped, tag = 'scoped memory for tpu_custom_call.1']
  %s0 = inlined_call_operand.vmem [shape: s32[1,8], index: 0, kind: input, shape index: {}]
  %s1 = inlined_call_operand.vmem [shape: f32[8,32], index: 1, kind: input, shape index: {}]
  %s2 = inlined_call_operand.vmem [shape: f32[32,32], index: 2, kind: input, shape index: {}]
  %s3 = inlined_call_operand.vmem [shape: f32[1,32], index: 3, kind: input, shape index: {}]
  %s4 = inlined_call_operand.vmem [shape: f32[32,1], index: 4, kind: input, shape index: {}]
  %s5 = inlined_call_operand.<no memory space> [shape: f32[1], index: 5, kind: input, shape index: {}]
  %s6 = inlined_call_operand.vmem [shape: f32[8,1], index: 6, kind: output, shape index: {}]
  %s7 = sld [smem:[#allocation0]]
  $region42: #{tpu_custom_call.1} parent=0
    _
  %s9 = ssub.s32 1, %s7
  %s10 = scalar_select 0, %s9, %s7
  %11 = sst [smem:[#allocation3]] %s5
  // Predicated region
  $region2: #{tpu_custom_call.1} parent=0 // pred_check
    _
  $region3: #{tpu_custom_call.1} parent=0 // pred_check_branch
    %13 = sbr.rel (0) target = $region5
  $region4: #{tpu_custom_call.1} parent=0 // pred_region
    _
  $region5: #{tpu_custom_call.1} parent=0 // pred_fallthru
    _
  // Predicated region
  $region6: #{tpu_custom_call.1} parent=0 // pred_check
    _
  $region7: #{tpu_custom_call.1} parent=0 // pred_check_branch
    %15 = sbr.rel (0) target = $region9
  $region8: #{tpu_custom_call.1} parent=0 // pred_region
    _
  $region9: #{tpu_custom_call.1} parent=0 // pred_fallthru
    _
  // Predicated region
  $region10: #{tpu_custom_call.1} parent=0 // pred_check
    _
  $region11: #{tpu_custom_call.1} parent=0 // pred_check_branch
    %17 = sbr.rel (0) target = $region13
  $region12: #{tpu_custom_call.1} parent=0 // pred_region
    _
  $region13: #{tpu_custom_call.1} parent=0 // pred_fallthru
    _
  // Predicated region
  $region14: #{tpu_custom_call.1} parent=0 // pred_check
    _
  $region15: #{tpu_custom_call.1} parent=0 // pred_check_branch
    %19 = sbr.rel (0) target = $region17
  $region16: #{tpu_custom_call.1} parent=0 // pred_region
    _
  $region17: #{tpu_custom_call.1} parent=0 // pred_fallthru
    _
  // Predicated region
  $region18: #{tpu_custom_call.1} parent=0 // pred_check
    _
  $region19: #{tpu_custom_call.1} parent=0 // pred_check_branch
    %21 = sbr.rel (0) target = $region21
  $region20: #{tpu_custom_call.1} parent=0 // pred_region
    _
  $region21: #{tpu_custom_call.1} parent=0 // pred_fallthru
    _
  // Predicated region
  $region22: #{tpu_custom_call.1} parent=0 // pred_check
    _
  $region23: #{tpu_custom_call.1} parent=0 // pred_check_branch
    %23 = sbr.rel (0) target = $region25
  $region24: #{tpu_custom_call.1} parent=0 // pred_region
    _
  $region25: #{tpu_custom_call.1} parent=0 // pred_fallthru
    _
  %p24 = scmp.eq.s32.totalorder 0, 0
  // Predicated region
  $region26: #{tpu_custom_call.1} parent=0 // pred_check
    %p25 = pneg %p24
  $region27: #{tpu_custom_call.1} parent=0 // pred_check_branch
    %27 = sbr.rel (%p25) target = $region29
  $region28: #{tpu_custom_call.1} parent=0 // pred_region
    %vm28 = vcmask 7168
    %29 = vst.msk [vmem:[#allocation2] sm:$0xff] %vm28, 0.0
  $region29: #{tpu_custom_call.1} parent=0 // pred_fallthru
    _
  %v30 = vld [vmem:[%s1] sm:$0xff]
  %v31 = vld [vmem:[%s2] sm:$0xff]
  %v32 = vld [vmem:[%s2 + $0x8] sm:$0xff]
  %v33 = vld [vmem:[%s2 + $0x10] sm:$0xff]
  %v34 = vld [vmem:[%s2 + $0x18] sm:$0xff]
  %v35 = vld [vmem:[%s3] sm:$0x1]
  %v37 = vlaneseq
  %v38 = vshrl.u32 %v37, 7
  %v39 = vsub.s32 0, %v38
  %v40 = vrot.slane %v35, %v39
  %vm42 = vcmask 261120
  %v44 = vsel %vm42, %v30, 0
  %46 = vmatprep.subr.mxu0 0.0
  %47 = vmatpush1.msra.mxu0 %v31
  %48 = vmatprep.subr.mxu0 0.0
  %49 = vmatpush1.msra.mxu0 %v32
  %50 = vmatprep.subr.mxu0 0.0
  %51 = vmatpush1.msra.mxu0 %v33
  %52 = vmatprep.subr.mxu0 0.0
  %53 = vmatpush1.msra.mxu0 %v34
  %54 = vmatprep.subr.mxu0 0.0
  %55 = vmatpush1.msra.mxu0 0.0
  %56 = vmatprep.subr.mxu0 0.0
  %57 = vmatpush1.msra.mxu0 0.0
  %58 = vmatprep.subr.mxu0 0.0
  %59 = vmatpush1.msra.mxu0 0.0
  %60 = vmatprep.subr.mxu0 0.0
  %61 = vmatpush1.msra.mxu0 0.0
  %62 = vmatprep.subr.mxu0 0.0
  %63 = vmatpush1.msra.mxu0 0.0
  %64 = vmatprep.subr.mxu0 0.0
  %65 = vmatpush1.msra.mxu0 0.0
  %66 = vmatprep.subr.mxu0 0.0
  %67 = vmatpush1.msra.mxu0 0.0
  %68 = vmatprep.subr.mxu0 0.0
  %69 = vmatpush1.msra.mxu0 0.0
  %70 = vmatprep.subr.mxu0 0.0
  %71 = vmatpush1.msra.mxu0 0.0
  %72 = vmatprep.subr.mxu0 0.0
  %73 = vmatpush1.msra.mxu0 0.0
  %74 = vmatprep.subr.mxu0 0.0
  %75 = vmatpush1.msra.mxu0 0.0
  %76 = vmatprep.subr.mxu0 0.0
  %77 = vmatpush1.msra.mxu0 0.0
  %78 = vmatprep.subr.mxu0 0.0
  %79 = vmatpush1.msra.mxu0 0.0
  %80 = vmatprep.subr.mxu0 0.0
  %81 = vmatpush1.msra.mxu0 0.0
  %82 = vmatprep.subr.mxu0 0.0
  %83 = vmatpush1.msra.mxu0 0.0
  %84 = vmatprep.subr.mxu0 0.0
  %85 = vmatpush1.msra.mxu0 0.0
  %86 = vmatprep.subr.mxu0 0.0
  %87 = vmatpush1.msra.mxu0 0.0
  %88 = vmatprep.subr.mxu0 0.0
  %89 = vmatpush1.msra.mxu0 0.0
  %90 = vmatprep.subr.mxu0 0.0
  %91 = vmatpush1.msra.mxu0 0.0
  %92 = vmatprep.subr.mxu0 0.0
  %93 = vmatpush1.msra.mxu0 0.0
  %94 = vmatprep.subr.mxu0 0.0
  %95 = vmatpush1.msra.mxu0 0.0
  %96 = vmatprep.subr.mxu0 0.0
  %97 = vmatpush1.msra.mxu0 0.0
  %98 = vmatprep.subr.mxu0 0.0
  %99 = vmatpush1.msra.mxu0 0.0
  %100 = vmatprep.subr.mxu0 0.0
  %101 = vmatpush1.msra.mxu0 0.0
  %102 = vmatprep.subr.mxu0 0.0
  %103 = vmatpush1.msra.mxu0 0.0
  %104 = vmatprep.subr.mxu0 0.0
  %105 = vmatpush1.msra.mxu0 0.0
  %106 = vmatprep.subr.mxu0 0.0
  %107 = vmatpush1.msra.mxu0 0.0
  %108 = vmatprep.subr.mxu0 0.0
  %109 = vmatpush1.msra.mxu0 0.0
  %110 = vmatprep.mubr.f32.mxu0 0.0
  %111 = vmatmul.mubr.f32.gmra.mrb[0].mxu0 %v44
  %v112 = vpop.f32.mrb[0].mxu0
  %v113 = vadd.f32 %v40, %v112
  %v114 = vpop.f32.mrb[0].mxu0
  %115 = vdwg.mxu0
  %v116 = vxor.u32 %v113, 2147483648
  %v117 = vmul.f32 %v116, 1.442695
  %v118 = vpow.pop %v117
  %v119 = vadd.f32 %v118, 1.0
  %v120 = vrcp.pop %v119
  %v121 = vmul.f32 1.0, %v120
  %v122 = vmul.f32 %v113, %v121
  %v123 = vld [vmem:[%s4] sm:$0xff]
  %v124 = vld [vmem:[%s4 + $0x8] sm:$0xff]
  %v125 = vld [vmem:[%s4 + $0x10] sm:$0xff]
  %v126 = vld [vmem:[%s4 + $0x18] sm:$0xff]
  %s127 = sld [smem:[#allocation3]]
  %v128 = vstv %s127
  %v130 = vsel %vm42, %v122, 0
  %132 = vmatprep.subr.mxu0 0.0
  %133 = vmatpush1.msra.mxu0 %v123
  %134 = vmatprep.subr.mxu0 0.0
  %135 = vmatpush1.msra.mxu0 %v124
  %136 = vmatprep.subr.mxu0 0.0
  %137 = vmatpush1.msra.mxu0 %v125
  %138 = vmatprep.subr.mxu0 0.0
  %139 = vmatpush1.msra.mxu0 %v126
  %140 = vmatprep.subr.mxu0 0.0
  %141 = vmatpush1.msra.mxu0 0.0
  %142 = vmatprep.subr.mxu0 0.0
  %143 = vmatpush1.msra.mxu0 0.0
  %144 = vmatprep.subr.mxu0 0.0
  %145 = vmatpush1.msra.mxu0 0.0
  %146 = vmatprep.subr.mxu0 0.0
  %147 = vmatpush1.msra.mxu0 0.0
  %148 = vmatprep.subr.mxu0 0.0
  %149 = vmatpush1.msra.mxu0 0.0
  %150 = vmatprep.subr.mxu0 0.0
  %151 = vmatpush1.msra.mxu0 0.0
  %152 = vmatprep.subr.mxu0 0.0
  %153 = vmatpush1.msra.mxu0 0.0
  %154 = vmatprep.subr.mxu0 0.0
  %155 = vmatpush1.msra.mxu0 0.0
  %156 = vmatprep.subr.mxu0 0.0
  %157 = vmatpush1.msra.mxu0 0.0
  %158 = vmatprep.subr.mxu0 0.0
  %159 = vmatpush1.msra.mxu0 0.0
  %160 = vmatprep.subr.mxu0 0.0
  %161 = vmatpush1.msra.mxu0 0.0
  %162 = vmatprep.subr.mxu0 0.0
  %163 = vmatpush1.msra.mxu0 0.0
  %164 = vmatprep.subr.mxu0 0.0
  %165 = vmatpush1.msra.mxu0 0.0
  %166 = vmatprep.subr.mxu0 0.0
  %167 = vmatpush1.msra.mxu0 0.0
  %168 = vmatprep.subr.mxu0 0.0
  %169 = vmatpush1.msra.mxu0 0.0
  %170 = vmatprep.subr.mxu0 0.0
  %171 = vmatpush1.msra.mxu0 0.0
  %172 = vmatprep.subr.mxu0 0.0
  %173 = vmatpush1.msra.mxu0 0.0
  %174 = vmatprep.subr.mxu0 0.0
  %175 = vmatpush1.msra.mxu0 0.0
  %176 = vmatprep.subr.mxu0 0.0
  %177 = vmatpush1.msra.mxu0 0.0
  %178 = vmatprep.subr.mxu0 0.0
  %179 = vmatpush1.msra.mxu0 0.0
  %180 = vmatprep.subr.mxu0 0.0
  %181 = vmatpush1.msra.mxu0 0.0
  %182 = vmatprep.subr.mxu0 0.0
  %183 = vmatpush1.msra.mxu0 0.0
  %184 = vmatprep.subr.mxu0 0.0
  %185 = vmatpush1.msra.mxu0 0.0
  %186 = vmatprep.subr.mxu0 0.0
  %187 = vmatpush1.msra.mxu0 0.0
  %188 = vmatprep.subr.mxu0 0.0
  %189 = vmatpush1.msra.mxu0 0.0
  %190 = vmatprep.subr.mxu0 0.0
  %191 = vmatpush1.msra.mxu0 0.0
  %192 = vmatprep.subr.mxu0 0.0
  %193 = vmatpush1.msra.mxu0 0.0
  %194 = vmatprep.subr.mxu0 0.0
  %195 = vmatpush1.msra.mxu0 0.0
  %196 = vmatprep.mubr.f32.mxu0 0.0
  %197 = vmatmul.mubr.f32.gmra.mrb[0].mxu0 %v130
  %v198 = vpop.f32.mrb[0].mxu0
  %v199 = vadd.f32 %v128, %v198
  %v200 = vpop.f32.mrb[0].mxu0
  %201 = vdwg.mxu0
  %v202 = vld [vmem:[%s0] sm:$0x1]
  %v203 = vlaneseq
  %v204 = vshrl.u32 %v203, 7
  %v205 = vlaneseq
  %v206 = vshrl.u32 %v205, 7
  %v207 = vsub.s32 0, %v206
  %v208 = vrot.slane %v202, %v207
  %vm209 = vcmp.eq.s32.totalorder %v208, %v204
  %v210 = vsel %vm209, 1, 0
  %v211 = vcvt.s32.f32 %v210
  %v212 = vld [vmem:[#allocation2] sm:$0xff]
  %vm213 = vcmask 64512
  %v215 = vsel %vm213, %v211, 0
  %217 = vmatprep.subr.mxu0 0.0
  %218 = vmatpush1.msra.mxu0 %v199
  %219 = vmatprep.subr.mxu0 0.0
  %220 = vmatpush1.msra.mxu0 0.0
  %221 = vmatprep.subr.mxu0 0.0
  %222 = vmatpush1.msra.mxu0 0.0
  %223 = vmatprep.subr.mxu0 0.0
  %224 = vmatpush1.msra.mxu0 0.0
  %225 = vmatprep.subr.mxu0 0.0
  %226 = vmatpush1.msra.mxu0 0.0
  %227 = vmatprep.subr.mxu0 0.0
  %228 = vmatpush1.msra.mxu0 0.0
  %229 = vmatprep.subr.mxu0 0.0
  %230 = vmatpush1.msra.mxu0 0.0
  %231 = vmatprep.subr.mxu0 0.0
  %232 = vmatpush1.msra.mxu0 0.0
  %233 = vmatprep.subr.mxu0 0.0
  %234 = vmatpush1.msra.mxu0 0.0
  %235 = vmatprep.subr.mxu0 0.0
  %236 = vmatpush1.msra.mxu0 0.0
  %237 = vmatprep.subr.mxu0 0.0
  %238 = vmatpush1.msra.mxu0 0.0
  %239 = vmatprep.subr.mxu0 0.0
  %240 = vmatpush1.msra.mxu0 0.0
  %241 = vmatprep.subr.mxu0 0.0
  %242 = vmatpush1.msra.mxu0 0.0
  %243 = vmatprep.subr.mxu0 0.0
  %244 = vmatpush1.msra.mxu0 0.0
  %245 = vmatprep.subr.mxu0 0.0
  %246 = vmatpush1.msra.mxu0 0.0
  %247 = vmatprep.subr.mxu0 0.0
  %248 = vmatpush1.msra.mxu0 0.0
  %249 = vmatprep.subr.mxu0 0.0
  %250 = vmatpush1.msra.mxu0 0.0
  %251 = vmatprep.subr.mxu0 0.0
  %252 = vmatpush1.msra.mxu0 0.0
  %253 = vmatprep.subr.mxu0 0.0
  %254 = vmatpush1.msra.mxu0 0.0
  %255 = vmatprep.subr.mxu0 0.0
  %256 = vmatpush1.msra.mxu0 0.0
  %257 = vmatprep.subr.mxu0 0.0
  %258 = vmatpush1.msra.mxu0 0.0
  %259 = vmatprep.subr.mxu0 0.0
  %260 = vmatpush1.msra.mxu0 0.0
  %261 = vmatprep.subr.mxu0 0.0
  %262 = vmatpush1.msra.mxu0 0.0
  %263 = vmatprep.subr.mxu0 0.0
  %264 = vmatpush1.msra.mxu0 0.0
  %265 = vmatprep.subr.mxu0 0.0
  %266 = vmatpush1.msra.mxu0 0.0
  %267 = vmatprep.subr.mxu0 0.0
  %268 = vmatpush1.msra.mxu0 0.0
  %269 = vmatprep.subr.mxu0 0.0
  %270 = vmatpush1.msra.mxu0 0.0
  %271 = vmatprep.subr.mxu0 0.0
  %272 = vmatpush1.msra.mxu0 0.0
  %273 = vmatprep.subr.mxu0 0.0
  %274 = vmatpush1.msra.mxu0 0.0
  %275 = vmatprep.subr.mxu0 0.0
  %276 = vmatpush1.msra.mxu0 0.0
  %277 = vmatprep.subr.mxu0 0.0
  %278 = vmatpush1.msra.mxu0 0.0
  %279 = vmatprep.subr.mxu0 0.0
  %280 = vmatpush1.msra.mxu0 0.0
  %281 = vmatprep.mubr.f32.mxu0 0.0
  %282 = vmatmul.mubr.f32.gmra.mrb[0].mxu0 %v215
  %v283 = vpop.f32.mrb[0].mxu0
  %v284 = vadd.f32 0.0, %v283
  %v285 = vpop.f32.mrb[0].mxu0
  %286 = vdwg.mxu0
  %v287 = vadd.f32 %v212, %v284
  %vm288 = vcmask 7168
  %289 = vst.msk [vmem:[#allocation2] sm:$0xff] %vm288, %v287
  // Predicated region
  $region30: #{tpu_custom_call.1} parent=0 // pred_check
    %p290 = pneg %p24
  $region31: #{tpu_custom_call.1} parent=0 // pred_check_branch
    %292 = sbr.rel (%p290) target = $region33
  $region32: #{tpu_custom_call.1} parent=0 // pred_region
    %v293 = vld [vmem:[#allocation2] sm:$0xff]
    %294 = vst.msk [vmem:[%s6] sm:$0xff] %vm288, %v293
  $region33: #{tpu_custom_call.1} parent=0 // pred_fallthru
    _
  // Predicated region
  $region34: #{tpu_custom_call.1} parent=0 // pred_check
    _
  $region35: #{tpu_custom_call.1} parent=0 // pred_check_branch
    %296 = sbr.rel (0) target = $region37
  $region36: #{tpu_custom_call.1} parent=0 // pred_region
    _
  $region37: #{tpu_custom_call.1} parent=0 // pred_fallthru
    _
  // Predicated region
  $region38: #{tpu_custom_call.1} parent=0 // pred_check
    _
  $region39: #{tpu_custom_call.1} parent=0 // pred_check_branch
    %298 = sbr.rel (0) target = $region41
  $region40: #{tpu_custom_call.1} parent=0 // pred_region
    _
  $region41: #{tpu_custom_call.1} parent=0 // pred_fallthru
    _

</llo_original>
